<compile_context>
chip_gen: v6e
topology: v6e:2x2x1
jax: 0.10.0
libtpu: 0.0.40
codegen_flags: <defaults>
</compile_context>

<pallas_src>
import functools

import jax
import jax.numpy as jnp
from jax import lax
from jax.experimental import pallas as pl
from jax.experimental.pallas import tpu as pltpu


def _round_up(a, b):
    return (a + b - 1) // b * b


def _patch_embed_kernel(x_ref, w_ref, b_ref, o_ref):
    # x_ref: (tm, Kp)  bf16 patch tile
    # w_ref: (Kp, Ep)  bf16 flattened conv weight (constant index across grid)
    # b_ref: (1, Ep)   f32 bias
    # o_ref: (tm, Ep)  output tile (x.dtype)
    acc = jnp.dot(x_ref[...], w_ref[...], preferred_element_type=jnp.float32)
    o_ref[...] = (acc + b_ref[...]).astype(o_ref.dtype)


def create_patches(x, weight, bias, patch_size, tm=None):
    """Equivalent of CreatePatches.forward.

    Args:
      x:      [B, C, H, W]  float32 (NCHW, like PyTorch)
      weight: [E, C, P, P]  Conv2d weight
      bias:   [E]           Conv2d bias
      patch_size: P
      tm:     optional M-tile override (must be 128-aligned)
    Returns:
      [B, N_patches, E]
    """
    B, C, H, W = x.shape
    E = weight.shape[0]
    P = patch_size
    assert H % P == 0 and W % P == 0
    nh, nw = H // P, W // P
    n_patches = nh * nw
    M = B * n_patches
    K = C * P * P

    # Lane-dense padded dims (multiples of 128). For real ViT (K=E=768) these
    # are no-ops.
    Kp = _round_up(K, 128)
    Ep = _round_up(E, 128)

    # M-tile: 128-aligned, capped at 512 so 2x(in+out) tiles + weight stay
    # well under v7x's 64 MiB VMEM (and v5e's 16 MiB scoped default).
    if tm is None:
        tm = min(512, _round_up(M, 128))
    Mp = _round_up(M, tm)

    # --- glue: extract non-overlapping patches in (c, kh, kw) order ---
    # [B, C, nh, P, nw, P] -> [B, nh, nw, C, P, P] -> [M, K], cast bf16 for MXU.
    xp = x.reshape(B, C, nh, P, nw, P)
    xp = jnp.transpose(xp, (0, 2, 4, 1, 3, 5)).reshape(M, K)
    xp = xp.astype(jnp.bfloat16)
    if (Mp, Kp) != (M, K):
        xp = jnp.pad(xp, ((0, Mp - M), (0, Kp - K)))

    # Conv weight [E, C, P, P] -> [K, E] (bf16), bias -> [1, E] (f32), padded.
    w2 = weight.reshape(E, K).T.astype(jnp.bfloat16)
    if (Kp, Ep) != (K, E):
        w2 = jnp.pad(w2, ((0, Kp - K), (0, Ep - E)))
    b2 = bias.astype(jnp.float32).reshape(1, E)
    if Ep != E:
        b2 = jnp.pad(b2, ((0, 0), (0, Ep - E)))

    out_itemsize = jnp.dtype(x.dtype).itemsize
    # Double-buffered input/output tiles + weight + bias.
    vmem_needed = (2 * tm * Kp * 2          # xp tiles (bf16)
                   + 2 * Kp * Ep * 2        # weight buffers (bf16)
                   + 2 * Ep * 4             # bias buffers (f32)
                   + 2 * tm * Ep * out_itemsize)
    vmem_limit = int(min(max(3 * vmem_needed, 32 * 2**20), 48 * 2**20))

    cost = pl.CostEstimate(
        flops=2 * Mp * Kp * Ep,
        transcendentals=0,
        bytes_accessed=(Mp * Kp * 2 + Kp * Ep * 2 + Ep * 4
                        + Mp * Ep * out_itemsize),
    )

    out = pl.pallas_call(
        _patch_embed_kernel,
        out_shape=jax.ShapeDtypeStruct((Mp, Ep), x.dtype),
        grid_spec=pltpu.PrefetchScalarGridSpec(
            num_scalar_prefetch=0,
            grid=(Mp // tm,),
            in_specs=[
                pl.BlockSpec((tm, Kp), lambda i: (i, 0)),
                pl.BlockSpec((Kp, Ep), lambda i: (0, 0)),
                pl.BlockSpec((1, Ep), lambda i: (0, 0)),
            ],
            out_specs=pl.BlockSpec((tm, Ep), lambda i: (i, 0)),
        ),
        compiler_params=pltpu.CompilerParams(
            dimension_semantics=("parallel",),
            # Let XLA fuse the patch-extraction transpose/pad/cast into the
            # Pallas input DMA instead of materializing xp in HBM.
            allow_input_fusion=[True, False, False],
            vmem_limit_bytes=vmem_limit,
        ),
        cost_estimate=cost,
    )(xp, w2, b2)

    # Drop M / E padding, reshape to [B, N_patches, E].
    return out[:M, :E].reshape(B, n_patches, E)


def _reference(x, weight, bias, patch_size):
    # Reference via lax conv (NCHW, OIHW) to check Conv2d semantics (f32).
    y = lax.conv_general_dilated(
        x, weight,
        window_strides=(patch_size, patch_size),
        padding="VALID",
        dimension_numbers=("NCHW", "OIHW", "NCHW"),
    ) + bias[None, :, None, None]
    B, E, nh, nw = y.shape
    return jnp.transpose(y.reshape(B, E, nh * nw), (0, 2, 1))


if __name__ == "__main__":
    # Small shapes consistent with the module:
    B, C, H, W = 2, 4, 16, 16
    patch_size = 4
    embed_dim = 32

    key = jax.random.PRNGKey(0)
    kx, kw, kb = jax.random.split(key, 3)
    x = jax.random.normal(kx, (B, C, H, W), dtype=jnp.float32)
    # Deterministic parameter init (synthetic, not a checkpoint load).
    weight = jax.random.normal(
        kw, (embed_dim, C, patch_size, patch_size), dtype=jnp.float32) * 0.02
    bias = jax.random.normal(kb, (embed_dim,), dtype=jnp.float32) * 0.02

    fn = jax.jit(functools.partial(create_patches, patch_size=patch_size))
    out = jax.block_until_ready(fn(x, weight, bias))

    ref = jax.block_until_ready(_reference(x, weight, bias, patch_size))
    n_patches = (H // patch_size) * (W // patch_size)
    assert out.shape == (B, n_patches, embed_dim)
    # bf16 MXU inputs with f32 accumulation -> modest tolerance vs f32 conv.
    assert jnp.allclose(out, ref, atol=2e-2, rtol=2e-2)

    print("KERNEL_OK")
</pallas_src>

<mosaic_0001>
module attributes {stable_mosaic.version = 11 : i64} {
  func.func @_patch_embed_kernel(%arg0: i32, %arg1: memref<128x128xbf16, #tpu.memory_space<vmem>>, %arg2: memref<128x128xbf16, #tpu.memory_space<vmem>>, %arg3: memref<1x128xf32, #tpu.memory_space<vmem>>, %arg4: memref<128x128xf32, #tpu.memory_space<vmem>>) attributes {dimension_semantics = [#tpu.dimension_semantics<parallel>], iteration_bounds = array<i64: 1>, scalar_prefetch = 0 : i64, scratch_operands = 0 : i64, tpu.core_type = #tpu.core_type<tc>, window_params = [{transform_indices = @transform_0, window_bounds = array<i64: 128, 128>}, {pipeline_mode = #tpu.pipeline_mode<synchronous>, transform_indices = @transform_1, window_bounds = array<i64: 128, 128>}, {pipeline_mode = #tpu.pipeline_mode<synchronous>, transform_indices = @transform_2, window_bounds = array<i64: 1, 128>}, {transform_indices = @transform_3, window_bounds = array<i64: 128, 128>}]} {
    %c0 = arith.constant 0 : index
    %c0_0 = arith.constant 0 : index
    %0 = vector.load %arg1[%c0, %c0_0] : memref<128x128xbf16, #tpu.memory_space<vmem>>, vector<128x128xbf16>
    %c0_1 = arith.constant 0 : index
    %c0_2 = arith.constant 0 : index
    %1 = vector.load %arg2[%c0_1, %c0_2] : memref<128x128xbf16, #tpu.memory_space<vmem>>, vector<128x128xbf16>
    %cst = arith.constant dense<0.000000e+00> : vector<128x128xf32>
    %2 = tpu.matmul %0, %1, %cst {dimension_numbers = #tpu.dot_dimension_numbers<[1], [0], [0], [1], [0, 0, 1, 1], [], []>} : vector<128x128xbf16>, vector<128x128xbf16>, vector<128x128xf32> -> vector<128x128xf32>
    %c0_3 = arith.constant 0 : index
    %c0_4 = arith.constant 0 : index
    %3 = vector.load %arg3[%c0_3, %c0_4] : memref<1x128xf32, #tpu.memory_space<vmem>>, vector<1x128xf32>
    %4 = vector.broadcast %3 : vector<1x128xf32> to vector<128x128xf32>
    %5 = arith.addf %2, %4 : vector<128x128xf32>
    %c0_5 = arith.constant 0 : index
    %c0_6 = arith.constant 0 : index
    %6 = vector.load %arg4[%c0_5, %c0_6] : memref<128x128xf32, #tpu.memory_space<vmem>>, vector<128x128xf32>
    tpu.vector_store %arg4[%c0_5, %c0_6], %5 {strides = array<i32>} : memref<128x128xf32, #tpu.memory_space<vmem>>, vector<128x128xf32>,
    return
  }
  func.func @transform_0(%arg0: i32) -> (i32, i32) {
    %c0_i32 = arith.constant 0 : i32
    %c0_i32_0 = arith.constant 0 : i32
    return %arg0, %c0_i32 : i32, i32
  }
  func.func @transform_1(%arg0: i32) -> (i32, i32) {
    %c0_i32 = arith.constant 0 : i32
    %c0_i32_0 = arith.constant 0 : i32
    %c0_i32_1 = arith.constant 0 : i32
    return %c0_i32, %c0_i32_0 : i32, i32
  }
  func.func @transform_2(%arg0: i32) -> (i32, i32) {
    %c0_i32 = arith.constant 0 : i32
    %c0_i32_0 = arith.constant 0 : i32
    %c0_i32_1 = arith.constant 0 : i32
    return %c0_i32, %c0_i32_0 : i32, i32
  }
  func.func @transform_3(%arg0: i32) -> (i32, i32) {
    %c0_i32 = arith.constant 0 : i32
    %c0_i32_0 = arith.constant 0 : i32
    return %arg0, %c0_i32 : i32, i32
  }
}

</mosaic_0001>

<llo_original>
// kernel: create_patches.2
$region0: #{create_patches.2}
  #allocation0 [shape = 'u32[]', space=smem, size = 0x4, offset = 0x4, fixed_abs, tag = 'smem constant byte address 0x4 - core index']
  #allocation1 [shape = 'u32[144,128]{1,0:T(1,128)}', space=vmem, size = 0x12000, scoped, tag = 'internal scratch']
  #allocation2 [shape = 'u32[2048]{0}', space=vmem, size = 0x2000, scoped, tag = 'scoped memory for create_patches.2']
  #allocation3 [shape = 'u32[2048]{0}', space=vmem, size = 0x2000, scoped, tag = 'scoped memory for create_patches.2']
  #allocation4 [shape = 'u32[2048]{0}', space=vmem, size = 0x2000, scoped, tag = 'scoped memory for create_patches.2']
  #allocation5 [shape = 'u32[2048]{0}', space=vmem, size = 0x2000, scoped, tag = 'scoped memory for create_patches.2']
  #allocation6 [shape = 'u32[2048]{0}', space=vmem, size = 0x2000, scoped, tag = 'scoped memory for create_patches.2']
  %s0 = inlined_call_operand.vmem [shape: bf16[128,128], index: 0, kind: input, shape index: {}]
  %s1 = inlined_call_operand.vmem [shape: f32[1,128], index: 1, kind: input, shape index: {}]
  %s2 = inlined_call_operand.vmem [shape: bf16[32,64], index: 2, kind: input, shape index: {}]
  %s3 = inlined_call_operand.<no memory space> [shape: bf16[], index: 3, kind: input, shape index: {}]
  %s4 = inlined_call_operand.vmem [shape: f32[128,128], index: 4, kind: output, shape index: {}]
  %s5 = sld [smem:[#allocation0]]
  $region22: #{create_patches.2} parent=0
    _
  %s7 = ssub.s32 1, %s5
  %s8 = scalar_select 0, %s7, %s5
  %v9 = vstv %s3
  %v10 = vunpack.i.l.bf16 %v9
  %v12 = vunpack.i.h.bf16 %v9
  $region1: #{create_patches.2} parent=0
    #allocation7 [shape = 'u8[32768]{0}', space=vmem, size = 0x8000, dematerialized = true, scoped, tag = 'FusionAdapter Buffer %fusion.1 = bf16[128,128]{1,0:T(8,128)(2,1)} fusion(%param_2.1, %param_3), kind=kLoop, calls=%fused_computation.2.clone, metadata={op_name="jit(create_patches)/jit(_pad)/pad" stack_frame_id=10}']
    // Predicated region
    $region2: #{create_patches.2} parent=1 // pred_check
      _
    $region3: #{create_patches.2} parent=1 // pred_check_branch
      %15 = sbr.rel (0) target = $region5
    $region4: #{create_patches.2} parent=1 // pred_region
      _
    $region5: #{create_patches.2} parent=1 // pred_fallthru
      _
    // Predicated region
    $region6: #{create_patches.2} parent=1 // pred_check
      _
    $region7: #{create_patches.2} parent=1 // pred_check_branch
      %17 = sbr.rel (0) target = $region9
    $region8: #{create_patches.2} parent=1 // pred_region
      _
    $region9: #{create_patches.2} parent=1 // pred_fallthru
      _
    // Predicated region
    $region10: #{create_patches.2} parent=1 // pred_check
      _
    $region11: #{create_patches.2} parent=1 // pred_check_branch
      %19 = sbr.rel (0) target = $region13
    $region12: #{create_patches.2} parent=1 // pred_region
      _
    $region13: #{create_patches.2} parent=1 // pred_fallthru
      _
    %s21 = sor.u32 255, 127
    %s22 = sand.u32 %s21, 85
    %s23 = sshrl.u32 %s22, 1
    %s24 = sor.u32 %s22, %s23
    %s25 = sand.u32 51, %s24
    %s26 = sshrl.u32 %s25, 2
    %s27 = sor.u32 %s25, %s26
    %s28 = sand.u32 15, %s27
    %v29 = vld [vmem:[%s2] sm:%s28]
    %v30 = vunpack.c.l.bf16 %v29
    %v31 = vunpack.c.h.bf16 %v29
    %v32 = vlaneseq
    %v33 = vand.u32 %v32, 127
    %vm35 = vcmp.lt.s32.totalorder %v33, 64
    %v36 = vsel %vm35, %v30, %v10
    %v37 = vpack.c.bf16 0.0, %v36
    %s39 = ssub.s32 16, 1
    %40 = vst [vmem:[#allocation7] sm:%s39] %v37
    %s41 = scalar_lea.vmem %s2, 4
    %s43 = sor.u32 255, 127
    %s44 = sand.u32 %s43, 85
    %s45 = sshrl.u32 %s44, 1
    %s46 = sor.u32 %s44, %s45
    %s47 = sand.u32 51, %s46
    %s48 = sshrl.u32 %s47, 2
    %s49 = sor.u32 %s47, %s48
    %s50 = sand.u32 15, %s49
    %v51 = vld [vmem:[%s41] sm:%s50]
    %v52 = vunpack.c.l.bf16 %v51
    %v53 = vunpack.c.h.bf16 %v51
    %v54 = vlaneseq
    %v55 = vand.u32 %v54, 127
    %vm57 = vcmp.lt.s32.totalorder %v55, 64
    %v58 = vsel %vm57, %v52, %v10
    %s59 = scalar_lea.vmem [#allocation7], 4
    %v60 = vpack.c.bf16 0.0, %v58
    %s62 = ssub.s32 16, 1
    %63 = vst [vmem:[%s59] sm:%s62] %v60
    %s64 = scalar_lea.vmem %s2, 8
    %s66 = sor.u32 255, 127
    %s67 = sand.u32 %s66, 85
    %s68 = sshrl.u32 %s67, 1
    %s69 = sor.u32 %s67, %s68
    %s70 = sand.u32 51, %s69
    %s71 = sshrl.u32 %s70, 2
    %s72 = sor.u32 %s70, %s71
    %s73 = sand.u32 15, %s72
    %v74 = vld [vmem:[%s64] sm:%s73]
    %v75 = vunpack.c.l.bf16 %v74
    %v76 = vunpack.c.h.bf16 %v74
    %v77 = vlaneseq
    %v78 = vand.u32 %v77, 127
    %vm80 = vcmp.lt.s32.totalorder %v78, 64
    %v81 = vsel %vm80, %v75, %v10
    %s82 = scalar_lea.vmem [#allocation7], 8
    %v83 = vpack.c.bf16 0.0, %v81
    %s85 = ssub.s32 16, 1
    %86 = vst [vmem:[%s82] sm:%s85] %v83
    %s87 = scalar_lea.vmem %s2, 12
    %s89 = sor.u32 255, 127
    %s90 = sand.u32 %s89, 85
    %s91 = sshrl.u32 %s90, 1
    %s92 = sor.u32 %s90, %s91
    %s93 = sand.u32 51, %s92
    %s94 = sshrl.u32 %s93, 2
    %s95 = sor.u32 %s93, %s94
    %s96 = sand.u32 15, %s95
    %v97 = vld [vmem:[%s87] sm:%s96]
    %v98 = vunpack.c.l.bf16 %v97
    %v99 = vunpack.c.h.bf16 %v97
    %v100 = vlaneseq
    %v101 = vand.u32 %v100, 127
    %vm103 = vcmp.lt.s32.totalorder %v101, 64
    %v104 = vsel %vm103, %v98, %v10
    %s105 = scalar_lea.vmem [#allocation7], 12
    %v106 = vpack.c.bf16 0.0, %v104
    %s108 = ssub.s32 16, 1
    %109 = vst [vmem:[%s105] sm:%s108] %v106
    %s110 = scalar_lea.vmem [#allocation7], 16
    %v111 = vpack.c.bf16 0.0, %v10
    %s113 = ssub.s32 16, 1
    %114 = vst [vmem:[%s110] sm:%s113] %v111
    %s115 = scalar_lea.vmem [#allocation7], 20
    %v116 = vpack.c.bf16 0.0, %v10
    %s118 = ssub.s32 16, 1
    %119 = vst [vmem:[%s115] sm:%s118] %v116
    %s120 = scalar_lea.vmem [#allocation7], 24
    %v121 = vpack.c.bf16 0.0, %v10
    %s123 = ssub.s32 16, 1
    %124 = vst [vmem:[%s120] sm:%s123] %v121
    %s125 = scalar_lea.vmem [#allocation7], 28
    %v126 = vpack.c.bf16 0.0, %v10
    %s128 = ssub.s32 16, 1
    %129 = vst [vmem:[%s125] sm:%s128] %v126
    %s130 = scalar_lea.vmem [#allocation7], 32
    %v131 = vpack.c.bf16 0.0, %v10
    %s133 = ssub.s32 16, 1
    %134 = vst [vmem:[%s130] sm:%s133] %v131
    %s135 = scalar_lea.vmem [#allocation7], 36
    %v136 = vpack.c.bf16 0.0, %v10
    %s138 = ssub.s32 16, 1
    %139 = vst [vmem:[%s135] sm:%s138] %v136
    %s140 = scalar_lea.vmem [#allocation7], 40
    %v141 = vpack.c.bf16 0.0, %v10
    %s143 = ssub.s32 16, 1
    %144 = vst [vmem:[%s140] sm:%s143] %v141
    %s145 = scalar_lea.vmem [#allocation7], 44
    %v146 = vpack.c.bf16 0.0, %v10
    %s148 = ssub.s32 16, 1
    %149 = vst [vmem:[%s145] sm:%s148] %v146
    %s150 = scalar_lea.vmem [#allocation7], 48
    %v151 = vpack.c.bf16 0.0, %v10
    %s153 = ssub.s32 16, 1
    %154 = vst [vmem:[%s150] sm:%s153] %v151
    %s155 = scalar_lea.vmem [#allocation7], 52
    %v156 = vpack.c.bf16 0.0, %v10
    %s158 = ssub.s32 16, 1
    %159 = vst [vmem:[%s155] sm:%s158] %v156
    %s160 = scalar_lea.vmem [#allocation7], 56
    %v161 = vpack.c.bf16 0.0, %v10
    %s163 = ssub.s32 16, 1
    %164 = vst [vmem:[%s160] sm:%s163] %v161
    %s165 = scalar_lea.vmem [#allocation7], 60
    %v166 = vpack.c.bf16 0.0, %v10
    %s168 = ssub.s32 16, 1
    %169 = vst [vmem:[%s165] sm:%s168] %v166
    %v171 = vld [vmem:[#allocation7] sm:$0xf]
    %v172 = vld [vmem:[#allocation7 + $0x4] sm:$0xf]
    %v173 = vld [vmem:[#allocation7 + $0x8] sm:$0xf]
    %v174 = vld [vmem:[#allocation7 + $0xc] sm:$0xf]
    %v175 = vld [vmem:[#allocation7 + $0x10] sm:$0xf]
    %v176 = vld [vmem:[#allocation7 + $0x14] sm:$0xf]
    %v177 = vld [vmem:[#allocation7 + $0x18] sm:$0xf]
    %v178 = vld [vmem:[#allocation7 + $0x1c] sm:$0xf]
    %v179 = vld [vmem:[#allocation7 + $0x20] sm:$0xf]
    %v180 = vld [vmem:[#allocation7 + $0x24] sm:$0xf]
    %v181 = vld [vmem:[#allocation7 + $0x28] sm:$0xf]
    %v182 = vld [vmem:[#allocation7 + $0x2c] sm:$0xf]
    %v183 = vld [vmem:[#allocation7 + $0x30] sm:$0xf]
    %v184 = vld [vmem:[#allocation7 + $0x34] sm:$0xf]
    %v185 = vld [vmem:[#allocation7 + $0x38] sm:$0xf]
    %v186 = vld [vmem:[#allocation7 + $0x3c] sm:$0xf]
    %v187 = vld [vmem:[%s0] sm:$0xf]
    %v188 = vld [vmem:[%s0 + $0x4] sm:$0xf]
    %v189 = vld [vmem:[%s0 + $0x8] sm:$0xf]
    %v190 = vld [vmem:[%s0 + $0xc] sm:$0xf]
    %v191 = vld [vmem:[%s0 + $0x10] sm:$0xf]
    %v192 = vld [vmem:[%s0 + $0x14] sm:$0xf]
    %v193 = vld [vmem:[%s0 + $0x18] sm:$0xf]
    %v194 = vld [vmem:[%s0 + $0x1c] sm:$0xf]
    %v195 = vld [vmem:[%s0 + $0x20] sm:$0xf]
    %v196 = vld [vmem:[%s0 + $0x24] sm:$0xf]
    %v197 = vld [vmem:[%s0 + $0x28] sm:$0xf]
    %v198 = vld [vmem:[%s0 + $0x2c] sm:$0xf]
    %v199 = vld [vmem:[%s0 + $0x30] sm:$0xf]
    %v200 = vld [vmem:[%s0 + $0x34] sm:$0xf]
    %v201 = vld [vmem:[%s0 + $0x38] sm:$0xf]
    %v202 = vld [vmem:[%s0 + $0x3c] sm:$0xf]
    %v203 = vld [vmem:[%s1] sm:$0x1]
    %v205 = vlaneseq
    %v206 = vshrl.u32 %v205, 7
    %v207 = vsub.s32 0, %v206
    %v208 = vrot.slane %v203, %v207
    %v226 = vunpack.c.l.b16 %v171
    %v227 = vunpack.c.l.b16 %v172
    %v228 = vunpack.c.l.b16 %v173
    %v229 = vunpack.c.l.b16 %v174
    %v230 = vunpack.c.l.b16 %v175
    %v231 = vunpack.c.l.b16 %v176
    %v232 = vunpack.c.l.b16 %v177
    %v233 = vunpack.c.l.b16 %v178
    %v234 = vunpack.c.l.b16 %v179
    %v235 = vunpack.c.l.b16 %v180
    %v236 = vunpack.c.l.b16 %v181
    %v237 = vunpack.c.l.b16 %v182
    %v238 = vunpack.c.l.b16 %v183
    %v239 = vunpack.c.l.b16 %v184
    %v240 = vunpack.c.l.b16 %v185
    %v241 = vunpack.c.l.b16 %v186
    %v242 = vpack.c.b16 %v227, %v226
    %v243 = vpack.c.b16 %v229, %v228
    %v244 = vpack.c.b16 %v231, %v230
    %v245 = vpack.c.b16 %v233, %v232
    %v246 = vpack.c.b16 %v235, %v234
    %v247 = vpack.c.b16 %v237, %v236
    %v248 = vpack.c.b16 %v239, %v238
    %v249 = vpack.c.b16 %v241, %v240
    %v274 = vunpack.c.l.b16 %v187
    %v275 = vunpack.c.l.b16 %v188
    %v276 = vunpack.c.l.b16 %v189
    %v277 = vunpack.c.l.b16 %v190
    %v278 = vunpack.c.l.b16 %v191
    %v279 = vunpack.c.l.b16 %v192
    %v280 = vunpack.c.l.b16 %v193
    %v281 = vunpack.c.l.b16 %v194
    %v282 = vunpack.c.l.b16 %v195
    %v283 = vunpack.c.l.b16 %v196
    %v284 = vunpack.c.l.b16 %v197
    %v285 = vunpack.c.l.b16 %v198
    %v286 = vunpack.c.l.b16 %v199
    %v287 = vunpack.c.l.b16 %v200
    %v288 = vunpack.c.l.b16 %v201
    %v289 = vunpack.c.l.b16 %v202
    %v290 = vpack.c.b16 %v275, %v274
    %v291 = vpack.c.b16 %v277, %v276
    %v292 = vpack.c.b16 %v279, %v278
    %v293 = vpack.c.b16 %v281, %v280
    %v294 = vpack.c.b16 %v283, %v282
    %v295 = vpack.c.b16 %v285, %v284
    %v296 = vpack.c.b16 %v287, %v286
    %v297 = vpack.c.b16 %v289, %v288
    %306 = vmatprep.subr.bf16.mxu0 0
    %307 = vmatpush1.bf16.msra.mxu0 %v297
    %308 = vmatprep.subr.bf16.mxu0 0
    %309 = vmatpush1.bf16.msra.mxu0 %v296
    %310 = vmatprep.subr.bf16.mxu0 0
    %311 = vmatpush1.bf16.msra.mxu0 %v295
    %312 = vmatprep.subr.bf16.mxu0 0
    %313 = vmatpush1.bf16.msra.mxu0 %v294
    %314 = vmatprep.subr.bf16.mxu0 0
    %315 = vmatpush1.bf16.msra.mxu0 %v293
    %316 = vmatprep.subr.bf16.mxu0 0
    %317 = vmatpush1.bf16.msra.mxu0 %v292
    %318 = vmatprep.subr.bf16.mxu0 0
    %319 = vmatpush1.bf16.msra.mxu0 %v291
    %320 = vmatprep.subr.bf16.mxu0 0
    %321 = vmatpush1.bf16.msra.mxu0 %v290
    %322 = vmatprep.subr.bf16.mxu0 0
    %323 = vmatpush2.bf16.msra.mxu0 0
    %324 = vmatprep.subr.bf16.mxu0 0
    %325 = vmatpush2.bf16.msra.mxu0 0
    %326 = vmatprep.subr.bf16.mxu0 0
    %327 = vmatpush2.bf16.msra.mxu0 0
    %328 = vmatprep.subr.bf16.mxu0 0
    %329 = vmatpush2.bf16.msra.mxu0 0
    %330 = vmatprep.subr.bf16.mxu0 0
    %331 = vmatpush2.bf16.msra.mxu0 0
    %332 = vmatprep.subr.bf16.mxu0 0
    %333 = vmatpush2.bf16.msra.mxu0 0
    %334 = vmatprep.subr.bf16.mxu0 0
    %335 = vmatpush2.bf16.msra.mxu0 0
    %336 = vmatprep.subr.bf16.mxu0 0
    %337 = vmatpush2.bf16.msra.mxu0 0
    %338 = vmatprep.mubr.bf16.mxu0 0
    %339 = vmatmul.mubr.bf16.gmra.mxu0 %v242
    %v340 = vpop.f32.mrf.mxu0
    %v341 = vadd.f32 %v208, %v340
    %v342 = vpop.f32.mrf.mxu0
    %v343 = vpop.f32.mrf.mxu0
    %v344 = vadd.f32 %v208, %v343
    %v345 = vpop.f32.mrf.mxu0
    %346 = vmatprep.mubr.bf16.mxu0 0
    %347 = vmatmul.mubr.bf16.gmra.mxu0 %v243
    %v348 = vpop.f32.mrf.mxu0
    %v349 = vadd.f32 %v208, %v348
    %v350 = vpop.f32.mrf.mxu0
    %v351 = vpop.f32.mrf.mxu0
    %v352 = vadd.f32 %v208, %v351
    %v353 = vpop.f32.mrf.mxu0
    %354 = vmatprep.mubr.bf16.mxu0 0
    %355 = vmatmul.mubr.bf16.gmra.mxu0 %v244
    %v356 = vpop.f32.mrf.mxu0
    %v357 = vadd.f32 %v208, %v356
    %v358 = vpop.f32.mrf.mxu0
    %v359 = vpop.f32.mrf.mxu0
    %v360 = vadd.f32 %v208, %v359
    %v361 = vpop.f32.mrf.mxu0
    %362 = vmatprep.mubr.bf16.mxu0 0
    %363 = vmatmul.mubr.bf16.gmra.mxu0 %v245
    %v364 = vpop.f32.mrf.mxu0
    %v365 = vadd.f32 %v208, %v364
    %v366 = vpop.f32.mrf.mxu0
    %v367 = vpop.f32.mrf.mxu0
    %v368 = vadd.f32 %v208, %v367
    %v369 = vpop.f32.mrf.mxu0
    %370 = vmatprep.mubr.bf16.mxu0 0
    %371 = vmatmul.mubr.bf16.gmra.mxu0 %v246
    %v372 = vpop.f32.mrf.mxu0
    %v373 = vadd.f32 %v208, %v372
    %v374 = vpop.f32.mrf.mxu0
    %v375 = vpop.f32.mrf.mxu0
    %v376 = vadd.f32 %v208, %v375
    %v377 = vpop.f32.mrf.mxu0
    %378 = vmatprep.mubr.bf16.mxu0 0
    %379 = vmatmul.mubr.bf16.gmra.mxu0 %v247
    %v380 = vpop.f32.mrf.mxu0
    %v381 = vadd.f32 %v208, %v380
    %v382 = vpop.f32.mrf.mxu0
    %v383 = vpop.f32.mrf.mxu0
    %v384 = vadd.f32 %v208, %v383
    %v385 = vpop.f32.mrf.mxu0
    %386 = vmatprep.mubr.bf16.mxu0 0
    %387 = vmatmul.mubr.bf16.gmra.mxu0 %v248
    %v388 = vpop.f32.mrf.mxu0
    %v389 = vadd.f32 %v208, %v388
    %v390 = vpop.f32.mrf.mxu0
    %v391 = vpop.f32.mrf.mxu0
    %v392 = vadd.f32 %v208, %v391
    %v393 = vpop.f32.mrf.mxu0
    %394 = vmatprep.mubr.bf16.mxu0 0
    %395 = vmatmul.mubr.bf16.gmra.mxu0 %v249
    %v396 = vpop.f32.mrf.mxu0
    %v397 = vadd.f32 %v208, %v396
    %v398 = vpop.f32.mrf.mxu0
    %v399 = vpop.f32.mrf.mxu0
    %v400 = vadd.f32 %v208, %v399
    %v401 = vpop.f32.mrf.mxu0
    %402 = vdwg.mxu0
    %403 = vst [vmem:[%s4] sm:$0xff] %v341
    %404 = vst [vmem:[%s4 + $0x8] sm:$0xff] %v344
    %405 = vst [vmem:[%s4 + $0x10] sm:$0xff] %v349
    %406 = vst [vmem:[%s4 + $0x18] sm:$0xff] %v352
    %407 = vst [vmem:[%s4 + $0x20] sm:$0xff] %v357
    %408 = vst [vmem:[%s4 + $0x28] sm:$0xff] %v360
    %409 = vst [vmem:[%s4 + $0x30] sm:$0xff] %v365
    %410 = vst [vmem:[%s4 + $0x38] sm:$0xff] %v368
    %411 = vst [vmem:[%s4 + $0x40] sm:$0xff] %v373
    %412 = vst [vmem:[%s4 + $0x48] sm:$0xff] %v376
    %413 = vst [vmem:[%s4 + $0x50] sm:$0xff] %v381
    %414 = vst [vmem:[%s4 + $0x58] sm:$0xff] %v384
    %415 = vst [vmem:[%s4 + $0x60] sm:$0xff] %v389
    %416 = vst [vmem:[%s4 + $0x68] sm:$0xff] %v392
    %417 = vst [vmem:[%s4 + $0x70] sm:$0xff] %v397
    %418 = vst [vmem:[%s4 + $0x78] sm:$0xff] %v400
    // Predicated region
    $region14: #{create_patches.2} parent=1 // pred_check
      _
    $region15: #{create_patches.2} parent=1 // pred_check_branch
      %420 = sbr.rel (0) target = $region17
    $region16: #{create_patches.2} parent=1 // pred_region
      _
    $region17: #{create_patches.2} parent=1 // pred_fallthru
      _
    // Predicated region
    $region18: #{create_patches.2} parent=1 // pred_check
      _
    $region19: #{create_patches.2} parent=1 // pred_check_branch
      %422 = sbr.rel (0) target = $region21
    $region20: #{create_patches.2} parent=1 // pred_region
      _
    $region21: #{create_patches.2} parent=1 // pred_fallthru
      _

</llo_original>
